<compile_context>
chip_gen: v7x
topology: tpu7x:2x2x1
jax: 0.10.0
libtpu: 0.0.40
codegen_flags: <defaults>
</compile_context>

<pallas_src>
import jax
import jax.numpy as jnp
from jax.experimental import pallas as pl
from jax.experimental.pallas import tpu as pltpu


def _module_wrapper_kernel(x_hbm_ref, y_hbm_ref, kl_ref):
    # forward: x = module(x) for module in children() -> no children => identity.
    # y aliases x via input_output_aliases={0: 0}: the output buffer *is* the
    # input buffer, so there is nothing to copy and nothing to DMA.
    del x_hbm_ref, y_hbm_ref
    # kl = 0.0 ; kl += m.kl_loss() for modules with kl_loss -> none => 0.0
    kl_ref[0] = jnp.float32(0.0)


def module_wrapper_forward(x):
    """Pallas implementation of ModuleWrapper().forward(x) -> (x, kl)."""
    y, kl = pl.pallas_call(
        _module_wrapper_kernel,
        out_shape=(
            jax.ShapeDtypeStruct(x.shape, x.dtype),    # y (aliases x, zero-copy)
            jax.ShapeDtypeStruct((1,), jnp.float32),   # kl scalar
        ),
        in_specs=[pl.BlockSpec(memory_space=pl.ANY)],  # raw HBM ref: no HBM<->VMEM DMA
        out_specs=(
            pl.BlockSpec(memory_space=pl.ANY),         # aliased to the input buffer
            pl.BlockSpec(memory_space=pltpu.SMEM),     # scalar lives in SMEM
        ),
        input_output_aliases={0: 0},                   # output 0 (y) is input 0 (x)
    )(x)
    return y, kl[0]


if __name__ == "__main__":
    key = jax.random.PRNGKey(0)
    x = jax.random.normal(key, (2, 4, 16, 16), dtype=jnp.float32)  # NCHW

    y, kl = module_wrapper_forward(x)
    jax.block_until_ready((y, kl))

    # Sanity checks against the reference semantics: identity output, kl == 0.0
    assert y.shape == x.shape and y.dtype == x.dtype
    assert bool(jnp.all(y == x))
    assert float(kl) == 0.0

    print("KERNEL_OK")
</pallas_src>

<mosaic_0001>
module attributes {stable_mosaic.version = 11 : i64} {
  func.func @_module_wrapper_kernel(%arg0: memref<2x4x16x16xf32, #tpu.memory_space<any>>, %arg1: memref<2x4x16x16xf32, #tpu.memory_space<any>>, %arg2: memref<1xf32, #tpu.memory_space<smem>>) attributes {dimension_semantics = [], scalar_prefetch = 0 : i64, scratch_operands = 0 : i64, tpu.core_type = #tpu.core_type<tc>} {
    %cst = arith.constant 0.000000e+00 : f32
    %c0 = arith.constant 0 : index
    %0 = memref.load %arg2[%c0] : memref<1xf32, #tpu.memory_space<smem>>
    memref.store %cst, %arg2[%c0] : memref<1xf32, #tpu.memory_space<smem>>
    return
  }
}

</mosaic_0001>

<llo_original>
// kernel: tpu_custom_call.1
$region0: #{tpu_custom_call.1}
  #allocation0 [shape = 'u32[]', space=smem, size = 0x4, offset = 0x4, fixed_abs, tag = 'smem constant byte address 0x4 - core index']
  #allocation1 [shape = 'u32[144,128]{1,0:T(1,128)}', space=vmem, size = 0x12000, scoped, tag = 'internal scratch']
  %s0 = inlined_call_operand.hbm [shape: f32[2,4,16,16], index: 0, kind: input, shape index: {}, may-alias: {0,1}]
  %s1 = inlined_call_operand.hbm [shape: f32[2,4,16,16], index: 1, kind: output, shape index: {0}, may-alias: {0,1}]
  %s2 = inlined_call_operand.hbm [shape: f32[1], index: 2, kind: output, shape index: {1}]
  %3 = xla_tuple %s1, %s2
  %s4 = sld [smem:[#allocation0]]
  $region10: #{tpu_custom_call.1} parent=0
    _
  %s6 = ssub.s32 1, %s4
  %s7 = scalar_select 0, %s6, %s4
  $region1: #{tpu_custom_call.1} parent=0
    #allocation2 [shape = 'u8[512]{0}', space=smem, size = 0x200, scoped, tag = 'output window, operand 1, single buffered']
    #allocation3 [shape = 's32[1]{0}', space=sflag, size = 0x4, scoped, tag = 'scoped memory for tpu_custom_call.1']
    %8 = vsyncpa [#allocation3], 0
    %s9 = scalar_lea.smem [#allocation2], 0
    %10 = sst [smem:[%s9]] 0.0
    // Predicated region
    $region2: #{tpu_custom_call.1} parent=1 // pred_check
      _
    $region3: #{tpu_custom_call.1} parent=1 // pred_check_branch
      %12 = sbr.rel (0) target = $region5
    $region4: #{tpu_custom_call.1} parent=1 // pred_region
      %s14 = ssub.s32 16, 16
      %15 = vsyncadd [#allocation3], %s14
      %18 = dma.smem_to_hbm [#allocation2], 16, %s2, [#allocation3]
    $region5: #{tpu_custom_call.1} parent=1 // pred_fallthru
      _
    // Predicated region
    $region6: #{tpu_custom_call.1} parent=1 // pred_check
      _
    $region7: #{tpu_custom_call.1} parent=1 // pred_check_branch
      %20 = sbr.rel (0) target = $region9
    $region8: #{tpu_custom_call.1} parent=1 // pred_region
      %21 = dma.done [#allocation3], 16
    $region9: #{tpu_custom_call.1} parent=1 // pred_fallthru
      _
    %22 = sfence
    %23 = vsyncpa [#allocation3], 1

</llo_original>
